<compile_context>
chip_gen: v6e
topology: v6e:2x2x1
jax: 0.10.0
libtpu: 0.0.40
codegen_flags: <defaults>
</compile_context>

<pallas_src>
import functools

import jax
import jax.numpy as jnp
from jax import lax
from jax.experimental import pallas as pl
from jax.experimental.pallas import tpu as pltpu


def _vector_loss_partials_kernel(pred_ref, tgt_ref, part_ref, *, tm, n_rows):
    """Per-tile partials.

    part_ref[0, 0] = sum over valid rows of this tile of | ||pred_r|| - ||tgt_r|| |
    part_ref[0, 1] = normalized row-1 dot product (tile 0 only, else 0)
    """
    i = pl.program_id(0)

    pred = pred_ref[...].astype(jnp.float32)   # (TM, D)
    tgt = tgt_ref[...].astype(jnp.float32)     # (TM, D)

    # Per-row L2 norms along the vector (lane) axis.
    pred_norms = jnp.sqrt(jnp.sum(pred * pred, axis=1, keepdims=True))  # (TM,1)
    tgt_norms = jnp.sqrt(jnp.sum(tgt * tgt, axis=1, keepdims=True))     # (TM,1)

    # Mask the tail rows of the (possibly partial) last block: those rows hold
    # undefined data, so select them away before reducing.  Cheap VPU ops on a
    # (TM,1) vector.
    row_ids = i * tm + lax.broadcasted_iota(jnp.int32, (tm, 1), 0)
    row_ok = row_ids < n_rows
    mag_sum = jnp.sum(jnp.where(row_ok, jnp.abs(pred_norms - tgt_norms), 0.0))

    part_ref[0, 0] = mag_sum
    part_ref[0, 1] = jnp.float32(0.0)

    # Global row index 1 always lives in tile 0 (tm >= 8 > 1).  Normalize
    # first, exactly like the PyTorch module, so large magnitudes cannot
    # overflow the raw dot product.  Reuses the per-row norms computed above.
    @pl.when(i == 0)
    def _direction():
        pn = pred_norms[1:2, 0:1]                       # (1, 1)
        tn = tgt_norms[1:2, 0:1]
        pn = jnp.where(pn == 0.0, 1.0, pn)              # 0-norm -> divide by 1
        tn = jnp.where(tn == 0.0, 1.0, tn)
        p1n = pred[1:2, :] / pn                         # (1, D)
        t1n = tgt[1:2, :] / tn
        part_ref[0, 1] = jnp.sum(p1n * t1n)


def vector_loss(pred, tgt, mag_w=0.4, dir_w=0.6, tm_max=4096):
    """Pallas TPU implementation of VectorLoss.forward. pred/tgt: (N, D)."""
    assert pred.shape == tgt.shape and pred.ndim == 2
    N, D = pred.shape
    # PyTorch would raise an IndexError for N < 2 (tensor[1]); require N >= 2.
    assert N >= 2, "VectorLoss requires at least 2 row vectors (indexes row 1)"

    itemsize = max(jnp.dtype(pred.dtype).itemsize,
                   jnp.dtype(tgt.dtype).itemsize)

    # ---- generation-aware VMEM budgeting --------------------------------
    try:
        vmem_cap = int(pltpu.get_tpu_info().vmem_capacity_bytes)
    except Exception:
        vmem_cap = 64 * 1024 * 1024          # conservative (v7x-sized) fallback
    # Residency budget: 2 inputs x 2 pipeline buffers (native dtype) plus one
    # live f32 cast of each tile.  Stay well under physical VMEM (v7x: 64 MiB)
    # while raising past the scoped defaults on v5e/v6e via vmem_limit_bytes.
    budget = min(40 * 1024 * 1024, vmem_cap // 2)
    per_row_bytes = D * (2 * 2 * itemsize + 2 * 4)

    tm = budget // per_row_bytes
    tm = max(8, min(int(tm_max), (int(tm) // 8) * 8))
    tm = min(tm, ((N + 7) // 8) * 8)          # never larger than rounded-up N
    num_tiles = pl.cdiv(N, tm)

    residency = 2 * 2 * tm * D * itemsize + 2 * tm * D * 4
    vmem_limit = int(min(vmem_cap * 3 // 4,
                         max(16 * 1024 * 1024, residency + 8 * 1024 * 1024)))

    kernel = functools.partial(_vector_loss_partials_kernel, tm=tm, n_rows=N)

    parts = pl.pallas_call(
        kernel,
        out_shape=jax.ShapeDtypeStruct((num_tiles, 2), jnp.float32),
        grid=(num_tiles,),
        in_specs=[
            pl.BlockSpec((tm, D), lambda i: (i, 0)),
            pl.BlockSpec((tm, D), lambda i: (i, 0)),
        ],
        out_specs=pl.BlockSpec((1, 2), lambda i: (i, 0),
                               memory_space=pltpu.SMEM),
        compiler_params=pltpu.CompilerParams(
            dimension_semantics=("parallel",),
            vmem_limit_bytes=vmem_limit),
    )(pred, tgt)

    # Tiny finalize in plain JAX (tree-sums the per-tile partials).
    mag_mean = jnp.sum(parts[:, 0]) / jnp.float32(N)
    dot_ = jnp.clip(parts[0, 1], -1.0, 1.0)
    direction_loss = 1.0 - dot_
    combined = jnp.float32(mag_w) * mag_mean + jnp.float32(dir_w) * direction_loss
    # torch.nan_to_num(combined, nan=0.0): nan -> 0, +/-inf -> f32 max/min.
    return jnp.nan_to_num(combined, nan=0.0)


def _reference(pred, tgt, mag_w=0.4, dir_w=0.6):
    """Pure-JAX reference mirroring the PyTorch code (sanity check)."""
    def normalize(v):
        n = jnp.linalg.norm(v, axis=1, keepdims=True)
        n = jnp.where(n == 0.0, 1.0, n)
        return v / n

    pred_n = normalize(pred)
    tgt_n = normalize(tgt)
    dot_ = jnp.clip(jnp.sum(tgt_n[1] * pred_n[1]), -1.0, 1.0)
    direction_loss = 1.0 - dot_
    mag_diffs = jnp.abs(
        jnp.linalg.norm(pred, axis=1) - jnp.linalg.norm(tgt, axis=1)
    )
    combined = mag_w * mag_diffs.mean() + dir_w * direction_loss
    return jnp.nan_to_num(combined, nan=0.0)


if __name__ == "__main__":
    key = jax.random.PRNGKey(0)
    k1, k2, k3, k4 = jax.random.split(key, 4)

    # Case 1: single-tile path (N=8, D=128) with a zero-norm row in pred
    # (exercises the 0-norm guard in the magnitude term).
    N, D = 8, 128
    pred = jax.random.normal(k1, (N, D), dtype=jnp.float32)
    tgt = jax.random.normal(k2, (N, D), dtype=jnp.float32)
    pred = pred.at[3].set(0.0)

    loss = jax.block_until_ready(vector_loss(pred, tgt))
    ref = _reference(pred, tgt)
    assert jnp.allclose(loss, ref, rtol=1e-5, atol=1e-5), (loss, ref)

    # Case 2: multi-tile path (grid of 3 tiles, partial last tile masked
    # in-kernel, N not a multiple of 8) with row 1 of tgt zeroed
    # (exercises the direction-term 0-norm guard and the tail-row mask).
    N2, D2 = 41, 128
    pred2 = jax.random.normal(k3, (N2, D2), dtype=jnp.float32)
    tgt2 = jax.random.normal(k4, (N2, D2), dtype=jnp.float32)
    tgt2 = tgt2.at[1].set(0.0)

    loss2 = jax.block_until_ready(vector_loss(pred2, tgt2, tm_max=16))
    ref2 = _reference(pred2, tgt2)
    assert jnp.allclose(loss2, ref2, rtol=1e-5, atol=1e-5), (loss2, ref2)

    print("KERNEL_OK")
</pallas_src>

<mosaic_0001>
module attributes {stable_mosaic.version = 11 : i64} {
  func.func @_vector_loss_partials_kernel(%arg0: i32, %arg1: memref<8x128xf32, #tpu.memory_space<vmem>>, %arg2: memref<8x128xf32, #tpu.memory_space<vmem>>, %arg3: memref<1x2xf32, #tpu.memory_space<smem>>) attributes {dimension_semantics = [#tpu.dimension_semantics<parallel>], iteration_bounds = array<i64: 1>, scalar_prefetch = 0 : i64, scratch_operands = 0 : i64, tpu.core_type = #tpu.core_type<tc>, window_params = [{transform_indices = @transform_0, window_bounds = array<i64: 8, 128>}, {transform_indices = @transform_1, window_bounds = array<i64: 8, 128>}, {transform_indices = @transform_2, window_bounds = array<i64: 1, 2>}]} {
    %c0 = arith.constant 0 : index
    %c0_0 = arith.constant 0 : index
    %0 = vector.load %arg1[%c0, %c0_0] : memref<8x128xf32, #tpu.memory_space<vmem>>, vector<8x128xf32>
    %c0_1 = arith.constant 0 : index
    %c0_2 = arith.constant 0 : index
    %1 = vector.load %arg2[%c0_1, %c0_2] : memref<8x128xf32, #tpu.memory_space<vmem>>, vector<8x128xf32>
    %2 = arith.mulf %0, %0 : vector<8x128xf32>
    %cst = arith.constant dense<0.000000e+00> : vector<8xf32>
    %3 = vector.multi_reduction <add>, %2, %cst [1] : vector<8x128xf32> to vector<8xf32>
    %4 = vector.shape_cast %3 : vector<8xf32> to vector<8x1xf32>
    %5 = math.sqrt %4 : vector<8x1xf32>
    %6 = arith.mulf %1, %1 : vector<8x128xf32>
    %cst_3 = arith.constant dense<0.000000e+00> : vector<8xf32>
    %7 = vector.multi_reduction <add>, %6, %cst_3 [1] : vector<8x128xf32> to vector<8xf32>
    %8 = vector.shape_cast %7 : vector<8xf32> to vector<8x1xf32>
    %9 = math.sqrt %8 : vector<8x1xf32>
    %c8_i32 = arith.constant 8 : i32
    %10 = arith.muli %arg0, %c8_i32 : i32
    %11 = tpu.iota {dimensions = array<i32: 0>} : vector<8x1xi32>
    %12 = vector.broadcast %10 : i32 to vector<8x1xi32>
    %13 = arith.addi %12, %11 : vector<8x1xi32>
    %c8_i32_4 = arith.constant 8 : i32
    %14 = vector.broadcast %c8_i32_4 : i32 to vector<8x1xi32>
    %15 = arith.cmpi slt, %13, %14 : vector<8x1xi32>
    %16 = arith.subf %5, %9 : vector<8x1xf32>
    %17 = math.absf %16 : vector<8x1xf32>
    %cst_5 = arith.constant 0.000000e+00 : f32
    %18 = vector.broadcast %cst_5 : f32 to vector<8x1xf32>
    %19 = arith.select %15, %17, %18 : vector<8x1xi1>, vector<8x1xf32>
    %20 = vector.shape_cast %19 : vector<8x1xf32> to vector<1x8x1xf32>
    %cst_6 = arith.constant dense<0.000000e+00> : vector<1xf32>
    %21 = vector.multi_reduction <add>, %20, %cst_6 [1, 2] : vector<1x8x1xf32> to vector<1xf32>
    %22 = vector.shape_cast %21 : vector<1xf32> to vector<1x1x1xf32>
    %23 = vector.extract %22[0, 0, 0] : f32 from vector<1x1x1xf32>
    %c0_7 = arith.constant 0 : index
    %c0_8 = arith.constant 0 : index
    %24 = memref.load %arg3[%c0_7, %c0_8] : memref<1x2xf32, #tpu.memory_space<smem>>
    memref.store %23, %arg3[%c0_7, %c0_8] : memref<1x2xf32, #tpu.memory_space<smem>>
    %cst_9 = arith.constant 0.000000e+00 : f32
    %c0_10 = arith.constant 0 : index
    %c1 = arith.constant 1 : index
    %25 = memref.load %arg3[%c0_10, %c1] : memref<1x2xf32, #tpu.memory_space<smem>>
    memref.store %cst_9, %arg3[%c0_10, %c1] : memref<1x2xf32, #tpu.memory_space<smem>>
    %c0_i32 = arith.constant 0 : i32
    %26 = arith.cmpi eq, %arg0, %c0_i32 : i32
    %27 = arith.extui %26 : i1 to i32
    %c0_i32_11 = arith.constant 0 : i32
    %28 = arith.cmpi ne, %27, %c0_i32_11 : i32
    scf.if %28 {
      %29 = vector.extract_strided_slice %5 {offsets = [1, 0], sizes = [1, 1], strides = [1, 1]} : vector<8x1xf32> to vector<1x1xf32>
      %30 = vector.extract_strided_slice %9 {offsets = [1, 0], sizes = [1, 1], strides = [1, 1]} : vector<8x1xf32> to vector<1x1xf32>
      %cst_12 = arith.constant 0.000000e+00 : f32
      %31 = vector.broadcast %cst_12 : f32 to vector<1x1xf32>
      %32 = arith.cmpf oeq, %29, %31 : vector<1x1xf32>
      %cst_13 = arith.constant 1.000000e+00 : f32
      %33 = vector.broadcast %cst_13 : f32 to vector<1x1xf32>
      %34 = arith.select %32, %33, %29 : vector<1x1xi1>, vector<1x1xf32>
      %cst_14 = arith.constant 0.000000e+00 : f32
      %35 = vector.broadcast %cst_14 : f32 to vector<1x1xf32>
      %36 = arith.cmpf oeq, %30, %35 : vector<1x1xf32>
      %cst_15 = arith.constant 1.000000e+00 : f32
      %37 = vector.broadcast %cst_15 : f32 to vector<1x1xf32>
      %38 = arith.select %36, %37, %30 : vector<1x1xi1>, vector<1x1xf32>
      %39 = vector.extract_strided_slice %0 {offsets = [1, 0], sizes = [1, 128], strides = [1, 1]} : vector<8x128xf32> to vector<1x128xf32>
      %40 = vector.broadcast %34 : vector<1x1xf32> to vector<1x128xf32>
      %41 = arith.divf %39, %40 : vector<1x128xf32>
      %42 = vector.extract_strided_slice %1 {offsets = [1, 0], sizes = [1, 128], strides = [1, 1]} : vector<8x128xf32> to vector<1x128xf32>
      %43 = vector.broadcast %38 : vector<1x1xf32> to vector<1x128xf32>
      %44 = arith.divf %42, %43 : vector<1x128xf32>
      %45 = arith.mulf %41, %44 : vector<1x128xf32>
      %46 = vector.shape_cast %45 : vector<1x128xf32> to vector<1x1x128xf32>
      %cst_16 = arith.constant dense<0.000000e+00> : vector<1xf32>
      %47 = vector.multi_reduction <add>, %46, %cst_16 [1, 2] : vector<1x1x128xf32> to vector<1xf32>
      %48 = vector.shape_cast %47 : vector<1xf32> to vector<1x1x1xf32>
      %49 = vector.extract %48[0, 0, 0] : f32 from vector<1x1x1xf32>
      %c0_17 = arith.constant 0 : index
      %c1_18 = arith.constant 1 : index
      %50 = memref.load %arg3[%c0_17, %c1_18] : memref<1x2xf32, #tpu.memory_space<smem>>
      memref.store %49, %arg3[%c0_17, %c1_18] : memref<1x2xf32, #tpu.memory_space<smem>>
    } else {
    }
    return
  }
  func.func @transform_0(%arg0: i32) -> (i32, i32) {
    %c0_i32 = arith.constant 0 : i32
    %c0_i32_0 = arith.constant 0 : i32
    return %arg0, %c0_i32 : i32, i32
  }
  func.func @transform_1(%arg0: i32) -> (i32, i32) {
    %c0_i32 = arith.constant 0 : i32
    %c0_i32_0 = arith.constant 0 : i32
    return %arg0, %c0_i32 : i32, i32
  }
  func.func @transform_2(%arg0: i32) -> (i32, i32) {
    %c0_i32 = arith.constant 0 : i32
    %c0_i32_0 = arith.constant 0 : i32
    return %arg0, %c0_i32 : i32, i32
  }
}

</mosaic_0001>

<llo_original>
// kernel: tpu_custom_call.1
$region0: #{tpu_custom_call.1}
  #allocation0 [shape = 'u32[]', space=smem, size = 0x4, offset = 0x4, fixed_abs, tag = 'smem constant byte address 0x4 - core index']
  #allocation1 [shape = 'u32[144,128]{1,0:T(1,128)}', space=vmem, size = 0x12000, scoped, tag = 'internal scratch']
  %s0 = inlined_call_operand.hbm [shape: f32[8,128], index: 0, kind: input, shape index: {}]
  %s1 = inlined_call_operand.hbm [shape: f32[8,128], index: 1, kind: input, shape index: {}]
  %s2 = inlined_call_operand.hbm [shape: f32[1,2], index: 2, kind: output, shape index: {}]
  %s3 = sld [smem:[#allocation0]]
  $region30: #{tpu_custom_call.1} parent=0
    _
  %s5 = ssub.s32 1, %s3
  %s6 = scalar_select 0, %s5, %s3
  $region1: #{tpu_custom_call.1} parent=0
    #allocation2 [shape = 'u8[4096]{0}', space=vmem, size = 0x1000, scoped, tag = 'input window, operand 0, single buffered']
    #allocation3 [shape = 's32[1]{0}', space=sflag, size = 0x4, scoped, tag = 'scoped memory for tpu_custom_call.1']
    #allocation4 [shape = 's32[1]{0}', space=sflag, size = 0x4, scoped, tag = 'scoped memory for tpu_custom_call.1']
    #allocation5 [shape = 'u8[4096]{0}', space=vmem, size = 0x1000, scoped, tag = 'input window, operand 1, single buffered']
    #allocation6 [shape = 's32[1]{0}', space=sflag, size = 0x4, scoped, tag = 'scoped memory for tpu_custom_call.1']
    #allocation7 [shape = 'u8[512]{0}', space=smem, size = 0x200, scoped, tag = 'output window, operand 0, single buffered']
    %7 = vsyncpa [#allocation3], 0
    %8 = vsyncpa [#allocation6], 0
    %9 = vsyncpa [#allocation4], 0
    // Predicated region
    $region2: #{tpu_custom_call.1} parent=1 // pred_check
      _
    $region3: #{tpu_custom_call.1} parent=1 // pred_check_branch
      %11 = sbr.rel (0) target = $region5
    $region4: #{tpu_custom_call.1} parent=1 // pred_region
      %s13 = ssub.s32 128, 128
      %14 = vsyncadd [#allocation3], %s13
      %s16 = sshll.u32 [#allocation2], 4
      %s17 = int_to_ptr.vmem [resolvable:$true] %s16
      %19 = dma.hbm_to_vmem [thread:$0]  %s0, 128, %s17, [#allocation3]
    $region5: #{tpu_custom_call.1} parent=1 // pred_fallthru
      _
    // Predicated region
    $region6: #{tpu_custom_call.1} parent=1 // pred_check
      _
    $region7: #{tpu_custom_call.1} parent=1 // pred_check_branch
      %21 = sbr.rel (0) target = $region9
    $region8: #{tpu_custom_call.1} parent=1 // pred_region
      %s23 = ssub.s32 128, 128
      %24 = vsyncadd [#allocation6], %s23
      %s26 = sshll.u32 [#allocation5], 4
      %s27 = int_to_ptr.vmem [resolvable:$true] %s26
      %29 = dma.hbm_to_vmem [thread:$0]  %s1, 128, %s27, [#allocation6]
    $region9: #{tpu_custom_call.1} parent=1 // pred_fallthru
      _
    // Predicated region
    $region10: #{tpu_custom_call.1} parent=1 // pred_check
      _
    $region11: #{tpu_custom_call.1} parent=1 // pred_check_branch
      %31 = sbr.rel (0) target = $region13
    $region12: #{tpu_custom_call.1} parent=1 // pred_region
      %32 = dma.done [#allocation3], 128
    $region13: #{tpu_custom_call.1} parent=1 // pred_fallthru
      _
    // Predicated region
    $region14: #{tpu_custom_call.1} parent=1 // pred_check
      _
    $region15: #{tpu_custom_call.1} parent=1 // pred_check_branch
      %34 = sbr.rel (0) target = $region17
    $region16: #{tpu_custom_call.1} parent=1 // pred_region
      %35 = dma.done [#allocation6], 128
    $region17: #{tpu_custom_call.1} parent=1 // pred_fallthru
      _
    %v36 = vld [vmem:[#allocation2] sm:$0xff]
    %v37 = vld [vmem:[#allocation5] sm:$0xff]
    %v38 = vmul.f32 %v36, %v36
    %39 = vadd.xlane.f32.xlu0 %v38
    %v40 = vpop.xlane.xlu0 %39
    %v41 = vrsqrt.pop %v40
    %v42 = vmul.f32 %v40, %v41
    %vm43 = vcmp.eq.f32.partialorder %v40, inf
    %v44 = vsel %vm43, %v40, %v42
    %vm45 = vcmp.eq.f32.partialorder %v40, 0.0
    %v46 = vand.u32 %v40, 2147483648
    %v47 = vsel %vm45, %v46, %v44
    %v48 = vmul.f32 %v37, %v37
    %49 = vadd.xlane.f32.xlu0 %v48
    %v50 = vpop.xlane.xlu0 %49
    %v51 = vrsqrt.pop %v50
    %v52 = vmul.f32 %v50, %v51
    %vm53 = vcmp.eq.f32.partialorder %v50, inf
    %v54 = vsel %vm53, %v50, %v52
    %vm55 = vcmp.eq.f32.partialorder %v50, 0.0
    %v56 = vand.u32 %v50, 2147483648
    %v57 = vsel %vm55, %v56, %v54
    %s58 = smul.u32 0, 8
    %v59 = vlaneseq
    %v60 = vshrl.u32 %v59, 7
    %v61 = vstv %s58
    %v62 = vadd.s32 %v61, %v60
    %vm63 = vcmp.lt.s32.totalorder %v62, 8
    %v64 = vsub.f32 %v47, %v57
    %v65 = vand.u32 2147483647, %v64
    %v66 = vsel %vm63, %v65, 0.0
    %vm67 = vcmask 7168
    %v68 = vsel %vm67, %v66, 0.0
    %69 = vadd.xlane.f32.xlu0 %v68
    %v70 = vpop.xlane.xlu0 %69
    %v71 = vrot.slane %v70, 4
    %v72 = vadd.f32 %v70, %v71
    %v73 = vrot.slane %v72, 2
    %v74 = vadd.f32 %v72, %v73
    %v75 = vrot.slane %v74, 1
    %v76 = vadd.f32 %v74, %v75
    %s77 = vtos %v76
    %s78 = scalar_lea.smem [#allocation7], 0
    %79 = sst [smem:[%s78]] %s77
    %s80 = scalar_lea.smem [#allocation7], 1
    %81 = sst [smem:[%s80]] 0.0
    %p82 = scmp.eq.s32.totalorder 0, 0
    // Predicated region
    $region18: #{tpu_custom_call.1} parent=1 // pred_check
      %p83 = pneg %p82
    $region19: #{tpu_custom_call.1} parent=1 // pred_check_branch
      %85 = sbr.rel (%p83) target = $region21
    $region20: #{tpu_custom_call.1} parent=1 // pred_region
      %vm86 = vcmp.eq.f32.partialorder %v47, 0.0
      %v87 = vsel %vm86, 1.0, %v47
      %vm88 = vcmp.eq.f32.partialorder %v57, 0.0
      %v89 = vsel %vm88, 1.0, %v57
      %v90 = vrcp.pop %v87
      %v91 = vmul.f32 %v36, %v90
      %v92 = vrcp.pop %v89
      %v93 = vmul.f32 %v37, %v92
      %v94 = vmul.f32 %v91, %v93
      %v96 = vrot.slane %v94, 1
      %vm98 = vcmask 1040384
      %v99 = vsel %vm98, %v96, 0.0
      %100 = vadd.xlane.f32.xlu0 %v99
      %v101 = vpop.xlane.xlu0 %100
      %v102 = vrot.slane %v101, 4
      %v103 = vadd.f32 %v101, %v102
      %v104 = vrot.slane %v103, 2
      %v105 = vadd.f32 %v103, %v104
      %v106 = vrot.slane %v105, 1
      %v107 = vadd.f32 %v105, %v106
      %s108 = vtos %v107
      %109 = sst [smem:[%s80]] %s108
    $region21: #{tpu_custom_call.1} parent=1 // pred_fallthru
      _
    // Predicated region
    $region22: #{tpu_custom_call.1} parent=1 // pred_check
      _
    $region23: #{tpu_custom_call.1} parent=1 // pred_check_branch
      %111 = sbr.rel (0) target = $region25
    $region24: #{tpu_custom_call.1} parent=1 // pred_region
      %s113 = ssub.s32 16, 16
      %114 = vsyncadd [#allocation4], %s113
      %117 = dma.smem_to_hbm [#allocation7], 16, %s2, [#allocation4]
    $region25: #{tpu_custom_call.1} parent=1 // pred_fallthru
      _
    // Predicated region
    $region26: #{tpu_custom_call.1} parent=1 // pred_check
      _
    $region27: #{tpu_custom_call.1} parent=1 // pred_check_branch
      %119 = sbr.rel (0) target = $region29
    $region28: #{tpu_custom_call.1} parent=1 // pred_region
      %120 = dma.done [#allocation4], 16
    $region29: #{tpu_custom_call.1} parent=1 // pred_fallthru
      _
    %121 = sfence
    %122 = vsyncpa [#allocation3], 1
    %123 = vsyncpa [#allocation6], 1
    %124 = vsyncpa [#allocation4], 1

</llo_original>
